<compile_context>
chip_gen: v5e
topology: v5e:2x2
jax: 0.10.0
libtpu: 0.0.40
codegen_flags: <defaults>
</compile_context>

<pallas_src>
import math

import jax
import jax.numpy as jnp
from jax import lax
from jax.experimental import pallas as pl
from jax.experimental.pallas import tpu as pltpu


# ---------------------------------------------------------------------------
# Cheap setup glue (runs once per shape, outside the hot path).
# ---------------------------------------------------------------------------

def _pos_patterns(H, W):
    """The 4 distinct positional-encoding patterns, flattened to (4, H*W) f32."""
    xx = jnp.broadcast_to(jnp.cos(jnp.linspace(0.0, math.pi, W))[None, :], (H, W))
    yy = jnp.broadcast_to(jnp.cos(jnp.linspace(0.0, math.pi, H))[:, None], (H, W))
    xy = jnp.broadcast_to(-jnp.cos(jnp.linspace(-math.pi, math.pi, W))[None, :], (H, W))
    ones = jnp.ones((H, W), jnp.float32)
    return jnp.stack([ones, xx, yy, xy], axis=0).reshape(4, H * W).astype(jnp.float32)


def _channel_pattern_ids(C):
    """Pattern id per channel: quarters [ones | xx | yy | xy], remainder=ones."""
    c_part = C // 4
    idx = jnp.arange(C)
    pat = jnp.zeros((C,), jnp.int32)
    pat = jnp.where((idx >= 1 * c_part) & (idx < 2 * c_part), 1, pat)
    pat = jnp.where((idx >= 2 * c_part) & (idx < 3 * c_part), 2, pat)
    pat = jnp.where((idx >= 3 * c_part) & (idx < 4 * c_part), 3, pat)
    return pat


# ---------------------------------------------------------------------------
# Kernels.
# ---------------------------------------------------------------------------

def _eca_gate_and_reweight(x, pooled, w_ref, o_ref):
    """3-tap channel conv (banded matvec) + sigmoid + channel re-weighting.

    x      : (C, HW) slab in native dtype
    pooled : (C, 1)  f32 frequency-weighted global average pool
    w_ref  : (3,)    f32 Conv1d taps in SMEM
    """
    C = x.shape[0]
    w0, w1, w2 = w_ref[0], w_ref[1], w_ref[2]
    # Banded (C, C) matrix built in-kernel from the 3 taps:
    #   band[r, r-1] = w0, band[r, r] = w1, band[r, r+1] = w2
    # so y = band @ pooled reproduces Conv1d(1,1,k=3,pad=1,bias=False) with
    # zero padding at the channel boundaries.
    r = lax.broadcasted_iota(jnp.int32, (C, C), 0)
    c = lax.broadcasted_iota(jnp.int32, (C, C), 1)
    d = r - c
    band = (jnp.where(d == 1, w0, 0.0)
            + jnp.where(d == 0, w1, 0.0)
            + jnp.where(d == -1, w2, 0.0))
    # TODO(synk): for very large C (>=1024) with small H*W, replace the O(C^2)
    # band build with a pltpu.roll-based 3-tap conv on a lane-layout pooled
    # vector; for typical shapes the build is fully hidden under the slab DMA.
    y = jnp.dot(band, pooled, preferred_element_type=jnp.float32)   # (C, 1)
    s = jax.nn.sigmoid(y).astype(x.dtype)                           # (C, 1)
    # Re-weight in the native dtype (broadcast across the lane-dense HW axis).
    o_ref[...] = (x * s).astype(o_ref.dtype)


def _fca_eca_kernel_f32(x_ref, pos_ref, w_ref, o_ref):
    """f32 inputs: exact fused VPU pooling against the full (C, HW) pos table."""
    x = x_ref[...]                                                  # (C, HW)
    inv_hw = 1.0 / x.shape[1]
    pooled = jnp.sum(x.astype(jnp.float32) * pos_ref[...],
                     axis=-1, keepdims=True) * inv_hw               # (C, 1) f32
    _eca_gate_and_reweight(x, pooled, w_ref, o_ref)


def _fca_eca_kernel_mxu(x_ref, pos_ref, q_ref, w_ref, o_ref):
    """Narrow dtypes (bf16, ...): pool on the MXU against the 4 pos patterns
    with f32 accumulation; never materializes x*pos or an f32 copy of x."""
    x = x_ref[...]                                                  # (C, HW)
    # t[c, k] = sum_s x[c, s] * pos[s, k]   -- big reduction on the idle MXU.
    t = jnp.dot(x, pos_ref[...].astype(x.dtype),
                preferred_element_type=jnp.float32)                 # (C, 4)
    # Select each channel's pattern via its one-hot (q already carries 1/HW).
    pooled = jnp.sum(t * q_ref[...], axis=-1, keepdims=True)        # (C, 1) f32
    _eca_gate_and_reweight(x, pooled, w_ref, o_ref)


# ---------------------------------------------------------------------------
# Wrapper.
# ---------------------------------------------------------------------------

def fca_eca_attn(x, conv_w):
    """Forward pass of FCA_ECA_Attn.  x: (B, C, H, W); conv_w: (3,) Conv1d taps."""
    B, C, H, W = x.shape
    HW = H * W
    x2 = x.reshape(B, C, HW)                      # lane-dense view (free, NCHW collapse)
    w = conv_w.reshape(3).astype(jnp.float32)

    pos4 = _pos_patterns(H, W)                    # (4, HW) f32
    pat = _channel_pattern_ids(C)                 # (C,) int32

    use_mxu_pool = x.dtype != jnp.float32
    if use_mxu_pool:
        pos_in = pos4.T                                              # (HW, 4)
        q_in = jax.nn.one_hot(pat, 4, dtype=jnp.float32) / float(HW)  # (C, 4)
        kernel = _fca_eca_kernel_mxu
        extra_inputs = (pos_in, q_in)
        extra_specs = [
            pl.BlockSpec((HW, 4), lambda b: (0, 0)),   # resident (fetched once)
            pl.BlockSpec((C, 4), lambda b: (0, 0)),    # resident (fetched once)
        ]
    else:
        pos_in = pos4[pat]                                           # (C, HW) f32, exact gather
        kernel = _fca_eca_kernel_f32
        extra_inputs = (pos_in,)
        extra_specs = [pl.BlockSpec((C, HW), lambda b: (0, 0))]      # resident

    itemsize = jnp.dtype(x.dtype).itemsize
    block_bytes = C * HW * itemsize
    # 2x double-buffered input block + 2x output block + resident pos (+ fused
    # pooling temp on the f32 path) + transient (C, C) band + slack.
    vmem_est = 4 * block_bytes + 2 * C * HW * 4 + C * C * 4 + (2 << 20)
    vmem_limit = int(min(max(vmem_est, 32 * 1024 * 1024), 128 * 1024 * 1024))
    # TODO(synk): if a single (C, H*W) slab exceeds the VMEM budget (v7x has
    # only 64 MiB physical), fall back to a channel-tiled two-pass variant.

    out2 = pl.pallas_call(
        kernel,
        out_shape=jax.ShapeDtypeStruct((B, C, HW), x.dtype),
        grid=(B,),
        in_specs=[
            pl.BlockSpec((None, C, HW), lambda b: (b, 0, 0)),      # per-batch slab
            *extra_specs,
            pl.BlockSpec(memory_space=pltpu.MemorySpace.SMEM),     # 3 conv taps
        ],
        out_specs=pl.BlockSpec((None, C, HW), lambda b: (b, 0, 0)),
        compiler_params=pltpu.CompilerParams(
            dimension_semantics=("parallel",),
            vmem_limit_bytes=vmem_limit,
        ),
    )(x2, *extra_inputs, w)
    return out2.reshape(B, C, H, W)


# ---------------------------------------------------------------------------
# Plain-JAX reference (independent replica of the PyTorch forward).
# ---------------------------------------------------------------------------

def _reference_pos_encoding(C, H, W):
    c = C // 4
    xx = jnp.broadcast_to(jnp.cos(jnp.linspace(0.0, math.pi, W))[None, :], (H, W))
    yy = jnp.broadcast_to(jnp.cos(jnp.linspace(0.0, math.pi, H))[:, None], (H, W))
    xy = jnp.broadcast_to(-jnp.cos(jnp.linspace(-math.pi, math.pi, W))[None, :], (H, W))
    pos = jnp.ones((C, H, W), jnp.float32)
    if c > 0:
        pos = pos.at[1 * c:2 * c].set(xx)
        pos = pos.at[2 * c:3 * c].set(yy)
        pos = pos.at[3 * c:4 * c].set(xy)
    return pos


def reference(x, conv_w):
    x = x.astype(jnp.float32)
    B, C, H, W = x.shape
    pos = _reference_pos_encoding(C, H, W)
    pooled = jnp.mean(x * pos[None], axis=(2, 3))                # (B, C)
    padded = jnp.pad(pooled, ((0, 0), (1, 1)))                   # Conv1d zero pad
    w = conv_w.astype(jnp.float32)
    y = (w[0] * padded[:, 0:C]
         + w[1] * padded[:, 1:C + 1]
         + w[2] * padded[:, 2:C + 2])
    s = jax.nn.sigmoid(y)
    return x * s[:, :, None, None]


if __name__ == "__main__":
    key = jax.random.PRNGKey(0)
    bound = 1.0 / math.sqrt(3.0)   # PyTorch Conv1d(1,1,3,bias=False) init range

    # f32 tolerance covers possible reduced-precision MXU passes on the tiny
    # (C,C)x(C,1) gating matvec; structural bugs give errors >= ~1e-2.
    configs = [
        ((2, 4, 16, 16), jnp.float32, 3e-3),   # channels split exactly in quarters
        ((2, 6, 8, 12), jnp.float32, 3e-3),    # leftover channels keep "ones" pattern
        ((2, 8, 16, 16), jnp.bfloat16, 2e-2),  # exercises the MXU pooling path
    ]

    for i, (shape, dtype, tol) in enumerate(configs):
        kx, kw, key = jax.random.split(key, 3)
        x = jax.random.normal(kx, shape, dtype=jnp.float32).astype(dtype)
        conv_w = jax.random.uniform(kw, (3,), jnp.float32, -bound, bound)

        out = fca_eca_attn(x, conv_w)
        jax.block_until_ready(out)
        assert out.shape == x.shape and out.dtype == x.dtype

        ref = reference(x.astype(jnp.float32), conv_w)
        assert jnp.allclose(out.astype(jnp.float32), ref, atol=tol, rtol=tol), (
            f"config {i}: mismatch vs reference")

    print("KERNEL_OK")
</pallas_src>

<mosaic_0001>
module attributes {stable_mosaic.version = 11 : i64} {
  func.func @_fca_eca_kernel_f32(%arg0: i32, %arg1: memref<1x4x256xf32, #tpu.memory_space<vmem>>, %arg2: memref<4x256xf32, #tpu.memory_space<vmem>>, %arg3: memref<3xf32, #tpu.memory_space<smem>>, %arg4: memref<1x4x256xf32, #tpu.memory_space<vmem>>) attributes {dimension_semantics = [#tpu.dimension_semantics<parallel>], iteration_bounds = array<i64: 2>, scalar_prefetch = 0 : i64, scratch_operands = 0 : i64, tpu.core_type = #tpu.core_type<tc>, window_params = [{transform_indices = @transform_0, window_bounds = array<i64: 1, 4, 256>}, {pipeline_mode = #tpu.pipeline_mode<synchronous>, transform_indices = @transform_1, window_bounds = array<i64: 4, 256>}, {transform_indices = @transform_2, window_bounds = array<i64: 3>}, {transform_indices = @transform_3, window_bounds = array<i64: 1, 4, 256>}]} {
    %c0 = arith.constant 0 : index
    %c0_0 = arith.constant 0 : index
    %c0_1 = arith.constant 0 : index
    %0 = vector.load %arg1[%c0, %c0_0, %c0_1] : memref<1x4x256xf32, #tpu.memory_space<vmem>>, vector<1x4x256xf32>
    %1 = vector.shape_cast %0 : vector<1x4x256xf32> to vector<4x256xf32>
    %c0_2 = arith.constant 0 : index
    %c0_3 = arith.constant 0 : index
    %2 = vector.load %arg2[%c0_2, %c0_3] : memref<4x256xf32, #tpu.memory_space<vmem>>, vector<4x256xf32>
    %3 = arith.mulf %1, %2 : vector<4x256xf32>
    %cst = arith.constant dense<0.000000e+00> : vector<4xf32>
    %4 = vector.multi_reduction <add>, %3, %cst [1] : vector<4x256xf32> to vector<4xf32>
    %5 = vector.shape_cast %4 : vector<4xf32> to vector<4x1xf32>
    %cst_4 = arith.constant 3.906250e-03 : f32
    %6 = vector.broadcast %cst_4 : f32 to vector<4x1xf32>
    %7 = arith.mulf %5, %6 : vector<4x1xf32>
    %c0_5 = arith.constant 0 : index
    %8 = memref.load %arg3[%c0_5] : memref<3xf32, #tpu.memory_space<smem>>
    %c1 = arith.constant 1 : index
    %9 = memref.load %arg3[%c1] : memref<3xf32, #tpu.memory_space<smem>>
    %c2 = arith.constant 2 : index
    %10 = memref.load %arg3[%c2] : memref<3xf32, #tpu.memory_space<smem>>
    %11 = tpu.iota {dimensions = array<i32: 0>} : vector<4x4xi32>
    %12 = tpu.iota {dimensions = array<i32: 1>} : vector<4x4xi32>
    %13 = arith.subi %11, %12 : vector<4x4xi32>
    %c1_i32 = arith.constant 1 : i32
    %14 = vector.broadcast %c1_i32 : i32 to vector<4x4xi32>
    %15 = arith.cmpi eq, %13, %14 : vector<4x4xi32>
    %cst_6 = arith.constant 0.000000e+00 : f32
    %16 = vector.broadcast %8 : f32 to vector<4x4xf32>
    %17 = vector.broadcast %cst_6 : f32 to vector<4x4xf32>
    %18 = arith.select %15, %16, %17 : vector<4x4xi1>, vector<4x4xf32>
    %c0_i32 = arith.constant 0 : i32
    %19 = vector.broadcast %c0_i32 : i32 to vector<4x4xi32>
    %20 = arith.cmpi eq, %13, %19 : vector<4x4xi32>
    %cst_7 = arith.constant 0.000000e+00 : f32
    %21 = vector.broadcast %9 : f32 to vector<4x4xf32>
    %22 = vector.broadcast %cst_7 : f32 to vector<4x4xf32>
    %23 = arith.select %20, %21, %22 : vector<4x4xi1>, vector<4x4xf32>
    %24 = arith.addf %18, %23 : vector<4x4xf32>
    %c-1_i32 = arith.constant -1 : i32
    %25 = vector.broadcast %c-1_i32 : i32 to vector<4x4xi32>
    %26 = arith.cmpi eq, %13, %25 : vector<4x4xi32>
    %cst_8 = arith.constant 0.000000e+00 : f32
    %27 = vector.broadcast %10 : f32 to vector<4x4xf32>
    %28 = vector.broadcast %cst_8 : f32 to vector<4x4xf32>
    %29 = arith.select %26, %27, %28 : vector<4x4xi1>, vector<4x4xf32>
    %30 = arith.addf %24, %29 : vector<4x4xf32>
    %cst_9 = arith.constant dense<0.000000e+00> : vector<4x1xf32>
    %31 = tpu.matmul %30, %7, %cst_9 {dimension_numbers = #tpu.dot_dimension_numbers<[1], [0], [0], [1], [0, 0, 1, 1], [], []>} : vector<4x4xf32>, vector<4x1xf32>, vector<4x1xf32> -> vector<4x1xf32>
    %32 = arith.negf %31 : vector<4x1xf32>
    %33 = math.exp %32 : vector<4x1xf32>
    %cst_10 = arith.constant 1.000000e+00 : f32
    %34 = vector.broadcast %cst_10 : f32 to vector<4x1xf32>
    %35 = arith.addf %34, %33 : vector<4x1xf32>
    %36 = arith.divf %34, %35 : vector<4x1xf32>
    %37 = vector.broadcast %36 : vector<4x1xf32> to vector<4x256xf32>
    %38 = arith.mulf %1, %37 : vector<4x256xf32>
    %c0_11 = arith.constant 0 : index
    %c0_12 = arith.constant 0 : index
    %c0_13 = arith.constant 0 : index
    %39 = vector.load %arg4[%c0_11, %c0_12, %c0_13] : memref<1x4x256xf32, #tpu.memory_space<vmem>>, vector<1x4x256xf32>
    %40 = vector.shape_cast %39 : vector<1x4x256xf32> to vector<4x256xf32>
    %41 = vector.shape_cast %38 : vector<4x256xf32> to vector<1x4x256xf32>
    tpu.vector_store %arg4[%c0_11, %c0_12, %c0_13], %41 {strides = array<i32>} : memref<1x4x256xf32, #tpu.memory_space<vmem>>, vector<1x4x256xf32>,
    return
  }
  func.func @transform_0(%arg0: i32) -> (i32, i32, i32) {
    %c0_i32 = arith.constant 0 : i32
    %c0_i32_0 = arith.constant 0 : i32
    %c0_i32_1 = arith.constant 0 : i32
    return %arg0, %c0_i32, %c0_i32_0 : i32, i32, i32
  }
  func.func @transform_1(%arg0: i32) -> (i32, i32) {
    %c0_i32 = arith.constant 0 : i32
    %c0_i32_0 = arith.constant 0 : i32
    %c0_i32_1 = arith.constant 0 : i32
    return %c0_i32, %c0_i32_0 : i32, i32
  }
  func.func @transform_2(%arg0: i32) -> i32 {
    %c0_i32 = arith.constant 0 : i32
    %c0_i32_0 = arith.constant 0 : i32
    return %c0_i32 : i32
  }
  func.func @transform_3(%arg0: i32) -> (i32, i32, i32) {
    %c0_i32 = arith.constant 0 : i32
    %c0_i32_0 = arith.constant 0 : i32
    %c0_i32_1 = arith.constant 0 : i32
    return %arg0, %c0_i32, %c0_i32_0 : i32, i32, i32
  }
}

</mosaic_0001>

<llo_original>
// kernel: tpu_custom_call.1
$region0: #{tpu_custom_call.1}
  #allocation0 [shape = 'u32[]', space=smem, size = 0x4, offset = 0x4, fixed_abs, tag = 'smem constant byte address 0x4 - core index']
  #allocation1 [shape = 'u32[72,128]{1,0:T(1,128)}', space=vmem, size = 0x9000, scoped, tag = 'internal scratch']
  %s0 = inlined_call_operand.hbm [shape: f32[2,4,256], index: 0, kind: input, shape index: {}]
  %s1 = inlined_call_operand.hbm [shape: f32[4,256], index: 1, kind: input, shape index: {}]
  %s2 = inlined_call_operand.vmem [shape: f32[3], index: 2, kind: input, shape index: {}]
  %s3 = inlined_call_operand.hbm [shape: f32[2,4,256], index: 3, kind: output, shape index: {}]
  %s4 = sld [smem:[#allocation0]]
  $region57: #{tpu_custom_call.1} parent=0
    _
  %s6 = ssub.s32 1, %s4
  %s7 = scalar_select 0, %s6, %s4
  $region1: #{tpu_custom_call.1} parent=0
    #allocation2 [shape = 'u8[8192]{0}', space=vmem, size = 0x2000, scoped, tag = 'input window, operand 0']
    #allocation3 [shape = 's32[2]{0}', space=sflag, size = 0x8, scoped, tag = 'scoped memory for tpu_custom_call.1']
    #allocation4 [shape = 's32[2]{0}', space=sflag, size = 0x8, scoped, tag = 'scoped memory for tpu_custom_call.1']
    #allocation5 [shape = 's32[2]{0}', space=sflag, size = 0x8, scoped, tag = 'scoped memory for tpu_custom_call.1']
    #allocation6 [shape = 'u8[4096]{0}', space=vmem, size = 0x1000, scoped, tag = 'input window, operand 1, single buffered']
    #allocation7 [shape = 's32[1]{0}', space=sflag, size = 0x4, scoped, tag = 'scoped memory for tpu_custom_call.1']
    #allocation8 [shape = 'u8[512]{0}', space=smem, size = 0x200, scoped, tag = 'input window, operand 2, single buffered']
    #allocation9 [shape = 'u8[8192]{0}', space=vmem, size = 0x2000, scoped, tag = 'output window, operand 0']
    %8 = vsyncpa [#allocation3], 0
    %s9 = scalar_lea.sflag [#allocation3], 1
    %10 = vsyncpa %s9, 0
    %11 = vsyncpa [#allocation7], 0
    %12 = vsyncpa [#allocation5], 0
    %13 = vsyncpa [#allocation4], 0
    %s14 = scalar_lea.sflag [#allocation4], 1
    %15 = vsyncpa %s14, 0
    loop: start=0, step=1, limit=4
    $region2: #{tpu_custom_call.1} parent=1 // loop_pre_header
      _
    $region3: #{tpu_custom_call.1} parent=1 // loop_header
      %s17 = sphi 0, %s21
      %p18 = scmp.ge.s32.totalorder %s17, 4
      %s27 = sphi 0, %s29
      %s30 = sphi 0, %s27
      %s31 = sphi 0, %s30
      %s47 = sphi 0, %s31
      %s51 = sphi 0, %s51
      %s53 = sphi 0, %s51
      %s54 = sphi 0, %s53
      %s68 = sphi 0, %s54
      %s72 = sphi 0, %s72
      %s74 = sphi 0, %s72
      %s75 = sphi 0, %s74
      %s89 = sphi 0, %s75
      %s95 = sphi 0, %s97
      %s98 = sphi 0, %s95
      %s99 = sphi 0, %s98
      %s115 = sphi 0, %s99
    $region4: #{tpu_custom_call.1} parent=1 // loop_header_branch
      %20 = sbr.rel (%p18) target = $region8
    $region5: #{tpu_custom_call.1} parent=1 // loop_body
      %s22 = ssub.s32 %s17, 1
      %s23 = ssub.s32 %s17, 2
      %s24 = sadd.s32 %s17, 1
      %s25 = ssub.s32 %s17, %s24
      %p26 = scmp.eq.s32.totalorder %s25, 0
      %s28 = sadd.s32 %s27, 1
      %s29 = scalar_select %p26, %s27, %s28
      %p32 = pneg %p26
      %p33 = scmp.eq.s32.totalorder %s17, 1
      %p34 = por %p32, %p33
      %p35 = scmp.ne.s32.totalorder %s27, %s30
      %p36 = scmp.eq.s32.totalorder %s17, 0
      %p37 = por %p35, %p36
      %p38 = scmp.ne.s32.totalorder %s27, %s30
      %p39 = scmp.eq.s32.totalorder %s22, 1
      %p40 = por %p38, %p39
      %p41 = scmp.ne.s32.totalorder %s30, %s31
      %p42 = scmp.eq.s32.totalorder %s22, 0
      %p43 = por %p41, %p42
      %p44 = scmp.ne.s32.totalorder %s30, %s31
      %p45 = scmp.eq.s32.totalorder %s23, 1
      %p46 = por %p44, %p45
      %p48 = scmp.ne.s32.totalorder %s31, %s47
      %p49 = scmp.eq.s32.totalorder %s23, 0
      %p50 = por %p48, %p49
      %s52 = sadd.s32 %s51, 1
      %p55 = scmp.eq.s32.totalorder %s17, 1
      %p56 = scmp.ne.s32.totalorder %s51, %s53
      %p57 = scmp.eq.s32.totalorder %s17, 0
      %p58 = por %p56, %p57
      %p59 = scmp.ne.s32.totalorder %s51, %s53
      %p60 = scmp.eq.s32.totalorder %s22, 1
      %p61 = por %p59, %p60
      %p62 = scmp.ne.s32.totalorder %s53, %s54
      %p63 = scmp.eq.s32.totalorder %s22, 0
      %p64 = por %p62, %p63
      %p65 = scmp.ne.s32.totalorder %s53, %s54
      %p66 = scmp.eq.s32.totalorder %s23, 1
      %p67 = por %p65, %p66
      %p69 = scmp.ne.s32.totalorder %s54, %s68
      %p70 = scmp.eq.s32.totalorder %s23, 0
      %p71 = por %p69, %p70
      %s73 = sadd.s32 %s72, 1
      %p76 = scmp.eq.s32.totalorder %s17, 1
      %p77 = scmp.ne.s32.totalorder %s72, %s74
      %p78 = scmp.eq.s32.totalorder %s17, 0
      %p79 = por %p77, %p78
      %p80 = scmp.ne.s32.totalorder %s72, %s74
      %p81 = scmp.eq.s32.totalorder %s22, 1
      %p82 = por %p80, %p81
      %p83 = scmp.ne.s32.totalorder %s74, %s75
      %p84 = scmp.eq.s32.totalorder %s22, 0
      %p85 = por %p83, %p84
      %p86 = scmp.ne.s32.totalorder %s74, %s75
      %p87 = scmp.eq.s32.totalorder %s23, 1
      %p88 = por %p86, %p87
      %p90 = scmp.ne.s32.totalorder %s75, %s89
      %p91 = scmp.eq.s32.totalorder %s23, 0
      %p92 = por %p90, %p91
      %s93 = ssub.s32 %s17, %s24
      %p94 = scmp.eq.s32.totalorder %s93, 0
      %s96 = sadd.s32 %s95, 1
      %s97 = scalar_select %p94, %s95, %s96
      %p100 = pneg %p94
      %p101 = scmp.eq.s32.totalorder %s17, 1
      %p102 = por %p100, %p101
      %p103 = scmp.ne.s32.totalorder %s95, %s98
      %p104 = scmp.eq.s32.totalorder %s17, 0
      %p105 = por %p103, %p104
      %p106 = scmp.ne.s32.totalorder %s95, %s98
      %p107 = scmp.eq.s32.totalorder %s22, 1
      %p108 = por %p106, %p107
      %p109 = scmp.ne.s32.totalorder %s98, %s99
      %p110 = scmp.eq.s32.totalorder %s22, 0
      %p111 = por %p109, %p110
      %p112 = scmp.ne.s32.totalorder %s98, %s99
      %p113 = scmp.eq.s32.totalorder %s23, 1
      %p114 = por %p112, %p113
      %p116 = scmp.ne.s32.totalorder %s99, %s115
      %p117 = scmp.eq.s32.totalorder %s23, 0
      %p118 = por %p116, %p117
      %p119 = scmp.le.s32.totalorder 1, %s17
      %p120 = scmp.lt.s32.totalorder %s17, 3
      %p121 = pnand %p119, %p120
      %p122 = pneg %p121
      // Predicated region
      $region9: #{tpu_custom_call.1} parent=5 // pred_check
        _
      $region10: #{tpu_custom_call.1} parent=5 // pred_check_branch
        %124 = sbr.rel (%p121) target = $region12
      $region11: #{tpu_custom_call.1} parent=5 // pred_region
        %s125 = ssub.s32 %s17, 1
        // Predicated region
        $region13: #{tpu_custom_call.1} parent=11 // pred_check
          %p126 = pneg %p64
        $region14: #{tpu_custom_call.1} parent=11 // pred_check_branch
          %128 = sbr.rel (%p126) target = $region16
        $region15: #{tpu_custom_call.1} parent=11 // pred_region
          %130 = vsyncadd [#allocation7], 0
          %s132 = sshll.u32 %s1, 4
          %s133 = int_to_ptr.hbm [resolvable:$true] %s132
          %s134 = sshll.u32 [#allocation6], 4
          %s135 = int_to_ptr.vmem [resolvable:$true] %s134
          %137 = dma.hbm_to_vmem [thread:$0]  %s133, 128, %s135, [#allocation7]
        $region16: #{tpu_custom_call.1} parent=11 // pred_fallthru
          _
        // Predicated region
        $region17: #{tpu_custom_call.1} parent=11 // pred_check
          %p138 = pneg %p85
        $region18: #{tpu_custom_call.1} parent=11 // pred_check_branch
          %140 = sbr.rel (%p138) target = $region20
        $region19: #{tpu_custom_call.1} parent=11 // pred_region
          %142 = vsyncadd [#allocation5], 0
          %s144 = sshll.u32 %s2, 4
          %s145 = int_to_ptr.vmem [resolvable:$true] %s144
          %147 = dma.vmem_to_smem %s145, 16, [#allocation8], [#allocation5]
        $region20: #{tpu_custom_call.1} parent=11 // pred_fallthru
          _
      $region12: #{tpu_custom_call.1} parent=5 // pred_fallthru
        _
      %p148 = scmp.lt.s32.totalorder %s17, 2
      // Predicated region
      $region21: #{tpu_custom_call.1} parent=5 // pred_check
        %p149 = pneg %p148
      $region22: #{tpu_custom_call.1} parent=5 // pred_check_branch
        %151 = sbr.rel (%p149) target = $region24
      $region23: #{tpu_custom_call.1} parent=5 // pred_region
        // Predicated region
        $region25: #{tpu_custom_call.1} parent=23 // pred_check
          %p152 = pneg %p37
        $region26: #{tpu_custom_call.1} parent=23 // pred_check_branch
          %154 = sbr.rel (%p152) target = $region28
        $region27: #{tpu_custom_call.1} parent=23 // pred_region
          %s155 = sand.u32 %s27, 1
          %s156 = scalar_lea.sflag [#allocation3], %s155
          %s157 = sand.u32 %s27, 1
          %s158 = smul.addr %s157, 8
          %s159 = scalar_lea.vmem [#allocation2], %s158
          %161 = vsyncadd %s156, 0
          %s162 = smul.addr %s17, 2
          %s163 = smul.addr %s162, 4
          %s164 = scalar_lea.hbm %s0, %s163
          %s166 = sshll.u32 %s164, 4
          %s167 = int_to_ptr.hbm [resolvable:$true] %s166
          %s168 = sshll.u32 %s159, 4
          %s169 = int_to_ptr.vmem [resolvable:$true] %s168
          %171 = dma.hbm_to_vmem [thread:$0]  %s167, 128, %s169, %s156
        $region28: #{tpu_custom_call.1} parent=23 // pred_fallthru
          _
      $region24: #{tpu_custom_call.1} parent=5 // pred_fallthru
        _
      %p172 = scmp.le.s32.totalorder 1, %s17
      %p173 = scmp.lt.s32.totalorder %s17, 3
      %p174 = pnand %p172, %p173
      %p175 = pneg %p174
      // Predicated region
      $region29: #{tpu_custom_call.1} parent=5 // pred_check
        _
      $region30: #{tpu_custom_call.1} parent=5 // pred_check_branch
        %177 = sbr.rel (%p174) target = $region32
      $region31: #{tpu_custom_call.1} parent=5 // pred_region
        %s178 = ssub.s32 %s17, 1
        %s179 = sand.u32 %s30, 1
        %s180 = scalar_lea.sflag [#allocation3], %s179
        %s181 = sand.u32 %s30, 1
        %s182 = smul.addr %s181, 8
        %s183 = scalar_lea.vmem [#allocation2], %s182
        // Predicated region
        $region33: #{tpu_custom_call.1} parent=31 // pred_check
          %p184 = pneg %p43
        $region34: #{tpu_custom_call.1} parent=31 // pred_check_branch
          %186 = sbr.rel (%p184) target = $region36
        $region35: #{tpu_custom_call.1} parent=31 // pred_region
          %188 = dma.done %s180, 128
        $region36: #{tpu_custom_call.1} parent=31 // pred_fallthru
          _
        // Predicated region
        $region37: #{tpu_custom_call.1} parent=31 // pred_check
          %p189 = pneg %p64
        $region38: #{tpu_custom_call.1} parent=31 // pred_check_branch
          %191 = sbr.rel (%p189) target = $region40
        $region39: #{tpu_custom_call.1} parent=31 // pred_region
          %193 = dma.done [#allocation7], 128
        $region40: #{tpu_custom_call.1} parent=31 // pred_fallthru
          _
        // Predicated region
        $region41: #{tpu_custom_call.1} parent=31 // pred_check
          %p194 = pneg %p85
        $region42: #{tpu_custom_call.1} parent=31 // pred_check_branch
          %196 = sbr.rel (%p194) target = $region44
        $region43: #{tpu_custom_call.1} parent=31 // pred_region
          %198 = dma.done [#allocation5], 16
        $region44: #{tpu_custom_call.1} parent=31 // pred_fallthru
          _
        %199 = sfence
        %s200 = sand.u32 %s30, 1
        %s201 = scalar_lea.sflag [#allocation3], %s200
        %s202 = sand.u32 %s30, 1
        %s203 = smul.addr %s202, 8
        %s204 = scalar_lea.vmem [#allocation2], %s203
        %p205 = pneg %p43
        %p206 = pneg %p40
        %p207 = pneg %p64
        %p208 = pneg %p61
        %p209 = pneg %p85
        %p210 = pneg %p82
        %p211 = pneg %p111
        %p212 = pneg %p108
        %s213 = sand.u32 %s98, 1
        %s214 = scalar_lea.sflag [#allocation4], %s213
        %s215 = sand.u32 %s98, 1
        %s216 = smul.addr %s215, 8
        %s217 = scalar_lea.vmem [#allocation9], %s216
        %v218 = vld [vmem:[%s183] sm:$0xff]
        %v219 = vld [vmem:[#allocation6] sm:$0xff]
        %v220 = vmul.f32 %v218, %v219
        %222 = vst [vmem:[#allocation1] ss:$2 sm:$0xff] %v220
        %v223 = vld.sshfl [vmem:[#allocation1] sm:$0xff pattern:$0x75316420]
        %v224 = vld.sshfl [vmem:[#allocation1 + $0x8] sm:$0xff pattern:$0x75316420]
        %vm227 = vcmask 1043456
        %v228 = vsel %vm227, %v223, 0.0
        %v229 = vsel %vm227, %v224, 0.0
        %v230 = vadd.f32 %v228, %v229
        %231 = vadd.xlane.f32.xlu0 %v230
        %v232 = vpop.xlane.xlu0 %231
        %v233 = vmul.f32 %v232, 0.00390625
        %s234 = sld [smem:[#allocation8]]
        %s235 = sld [smem:[#allocation8 + $0x1]]
        %s236 = sld [smem:[#allocation8 + $0x2]]
        %v237 = vlaneseq
        %v238 = vshrl.u32 %v237, 7
        %v239 = vlaneseq
        %v240 = vand.u32 %v239, 127
        %v241 = vsub.s32 %v238, %v240
        %vm242 = vcmp.eq.s32.totalorder %v241, 1
        %v243 = vstv %s234
        %v244 = vsel %vm242, %v243, 0.0
        %vm245 = vcmp.eq.s32.totalorder %v241, 0
        %v246 = vstv %s235
        %v247 = vsel %vm245, %v246, 0.0
        %v248 = vadd.f32 %v244, %v247
        %vm249 = vcmp.eq.s32.totalorder %v241, 4294967295
        %v250 = vstv %s236
        %v251 = vsel %vm249, %v250, 0.0
        %v252 = vadd.f32 %v248, %v251
        %vm253 = vcmask 31744
        %v255 = vsel %vm253, %v252, 0
        %v258 = vsel %vm227, %v233, 0
        %260 = vmatpush.msra.mxu0 0.0
        %261 = vmatpush.msra.mxu0 0.0
        %262 = vmatpush.msra.mxu0 0.0
        %263 = vmatpush.msra.mxu0 0.0
        %264 = vmatpush.msra.mxu0 0.0
        %265 = vmatpush.msra.mxu0 0.0
        %266 = vmatpush.msra.mxu0 0.0
        %267 = vmatpush.msra.mxu0 0.0
        %268 = vmatpush.msra.mxu0 0.0
        %269 = vmatpush.msra.mxu0 0.0
        %270 = vmatpush.msra.mxu0 0.0
        %271 = vmatpush.msra.mxu0 0.0
        %272 = vmatpush.msra.mxu0 0.0
        %273 = vmatpush.msra.mxu0 0.0
        %274 = vmatpush.msra.mxu0 0.0
        %275 = vmatpush.msra.mxu0 %v258
        %276 = vmatmul.f32.gmra.mxu0 %v255
        %v277 = vpop.f32.mrf.mxu0
        %v278 = vadd.f32 0.0, %v277
        %279 = vdwg.mxu0
        %v280 = vxor.u32 %v278, 2147483648
        %v281 = vmul.f32 %v280, 1.442695
        %v282 = vpow.pop %v281
        %v283 = vadd.f32 %v282, 1.0
        %v284 = vrcp.pop %v283
        %v285 = vmul.f32 %v283, %v284
        %v286 = vsub.f32 1.0, %v285
        %v287 = vmul.f32 %v284, %v286
        %v288 = vadd.f32 %v284, %v287
        %vm289 = vweird.f32 %v283
        %vm290 = vweird.f32 %v284
        %vm291 = vmor %vm289, %vm290
        %v292 = vsel %vm291, %v284, %v288
        %v293 = vand.u32 2147483647, %v283
        %vm294 = vcmp.eq.f32.partialorder %v293, 8.507059e+37
        %v295 = vand.u32 %v283, 2147483648
        %v296 = vor.u32 1.1754944e-38, %v295
        %v297 = vsel %vm294, %v296, %v292
        %v298 = vmul.f32 1.0, %v297
        %300 = vset.pattern.permute.xlu0 0
        %301 = vperm.xlu0 %300, %v298
        %v302 = vpop.permute.xlu0 %301
        %v304 = vunpack.c.l.s4 839922192
        %v305 = vunpack.c.0.s8 %v304
        %v306 = vperm.slane %v302, %v305
        %v308 = vmul.f32 %v218, %v306
        %309 = vst [vmem:[%s217] sm:$0xff] %v308
        %s310 = sand.u32 %s98, 1
        %s311 = scalar_lea.sflag [#allocation4], %s310
        %s312 = sand.u32 %s98, 1
        %s313 = smul.addr %s312, 8
        %s314 = scalar_lea.vmem [#allocation9], %s313
        // Predicated region
        $region45: #{tpu_custom_call.1} parent=31 // pred_check
          %p315 = pneg %p108
        $region46: #{tpu_custom_call.1} parent=31 // pred_check_branch
          %317 = sbr.rel (%p315) target = $region48
        $region47: #{tpu_custom_call.1} parent=31 // pred_region
          %319 = vsyncadd %s311, 0
          %s320 = smul.addr %s22, 2
          %s321 = smul.addr %s320, 4
          %s322 = scalar_lea.hbm %s3, %s321
          %s324 = sshll.u32 %s314, 4
          %s325 = int_to_ptr.vmem [resolvable:$true] %s324
          %s326 = sshll.u32 %s322, 4
          %s327 = int_to_ptr.hbm [resolvable:$true] %s326
          %329 = dma.vmem_to_hbm [thread:$0]  %s325, 128, %s327, %s311
        $region48: #{tpu_custom_call.1} parent=31 // pred_fallthru
          _
      $region32: #{tpu_custom_call.1} parent=5 // pred_fallthru
        _
      %p330 = scmp.le.s32.totalorder 2, %s17
      // Predicated region
      $region49: #{tpu_custom_call.1} parent=5 // pred_check
        %p331 = pneg %p330
      $region50: #{tpu_custom_call.1} parent=5 // pred_check_branch
        %333 = sbr.rel (%p331) target = $region52
      $region51: #{tpu_custom_call.1} parent=5 // pred_region
        %s334 = ssub.s32 %s17, 2
        // Predicated region
        $region53: #{tpu_custom_call.1} parent=51 // pred_check
          %p335 = pneg %p114
        $region54: #{tpu_custom_call.1} parent=51 // pred_check_branch
          %337 = sbr.rel (%p335) target = $region56
        $region55: #{tpu_custom_call.1} parent=51 // pred_region
          %s338 = sand.u32 %s99, 1
          %s339 = scalar_lea.sflag [#allocation4], %s338
          %s340 = sand.u32 %s99, 1
          %s341 = smul.addr %s340, 8
          %s342 = scalar_lea.vmem [#allocation9], %s341
          %344 = dma.done %s339, 128
        $region56: #{tpu_custom_call.1} parent=51 // pred_fallthru
          _
      $region52: #{tpu_custom_call.1} parent=5 // pred_fallthru
        _
    $region6: #{tpu_custom_call.1} parent=1 // loop_footer
      %s21 = sadd.s32 1, %s17
    $region7: #{tpu_custom_call.1} parent=1 // loop_footer_branch
      %16 = sbr.rel target = $region3
    $region8: #{tpu_custom_call.1} parent=1 // loop_exit
      _
    %345 = vsyncpa [#allocation3], 1
    %s346 = scalar_lea.sflag [#allocation3], 1
    %347 = vsyncpa %s346, 1
    %348 = vsyncpa [#allocation7], 1
    %349 = vsyncpa [#allocation4], 1
    %s350 = scalar_lea.sflag [#allocation4], 1
    %351 = vsyncpa %s350, 1
    %352 = vsyncpa [#allocation5], 1
    %s353 = scalar_lea.sflag [#allocation5], 1
    %354 = vsyncpa %s353, 1

</llo_original>
